<compile_context>
chip_gen: v6e
topology: v6e:2x2x1
jax: 0.10.0
libtpu: 0.0.40
codegen_flags: <defaults>
</compile_context>

<pallas_src>
import numpy as np
import jax
import jax.numpy as jnp
from jax.experimental import pallas as pl
from jax.experimental.pallas import tpu as pltpu


def _select_kernel(pooled_ref, cls_ref, labels_ref, cw_ref,
                   w1p_ref, w1c_ref, b1_ref,
                   w2_ref, b2_ref,
                   w3_ref, b3_ref,
                   logits_ref, loss_ref):
    # Per-grid-step shapes (all static):
    #   pooled_ref : (Bt, H)          cls_ref    : (Bt*S, R)     labels_ref : (Bt*S, 1) int32
    #   cw_ref     : (2,)  [SMEM]     w1p (H,D1) w1c (R,D1) b1 (1,D1)
    #   w2 (D1,D2) b2 (1,D2)          w3 (D2,2)  b3 (1,2)
    #   logits_ref : (Bt*S, 2)        loss_ref   : (1, 1)  (per-step partial, no accumulation)
    bt = pooled_ref.shape[0]
    rows = cls_ref.shape[0]
    s = rows // bt
    d1 = w1p_ref.shape[1]

    # --- select_classifier (the concat is fused as a split first-layer matmul) ---
    # Pooled part computed once per batch item, then broadcast across the S spans.
    h1p = jnp.dot(pooled_ref[...], w1p_ref[...],
                  preferred_element_type=jnp.float32)                    # (Bt, D1)
    h1c = jnp.dot(cls_ref[...], w1c_ref[...],
                  preferred_element_type=jnp.float32)                    # (Bt*S, D1)
    h1 = h1c.reshape(bt, s, d1) + h1p[:, None, :] + b1_ref[...]          # broadcast over S
    h1 = jnp.maximum(h1, 0.0).reshape(rows, d1)                          # ReLU (dropout = id)

    h2 = jnp.dot(h1, w2_ref[...], preferred_element_type=jnp.float32) + b2_ref[...]
    h2 = jnp.maximum(h2, 0.0)                                            # (Bt*S, D2)

    lg = jnp.dot(h2, w3_ref[...], preferred_element_type=jnp.float32) + b3_ref[...]  # (Bt*S, 2)
    logits_ref[...] = lg.astype(logits_ref.dtype)

    # --- weighted CrossEntropyLoss(reduction='sum') partial for this tile ---
    # Explicit 2-column arithmetic: logsumexp(a, b) = max(a,b) + log1p(exp(-|a-b|)).
    # One exp + one log1p on the EUP, no cross-lane reductions, no iota / one-hot.
    lg0 = lg[:, 0:1]                                                     # (rows, 1)
    lg1 = lg[:, 1:2]                                                     # (rows, 1)
    m = jnp.maximum(lg0, lg1)
    lse = m + jnp.log1p(jnp.exp(-jnp.abs(lg0 - lg1)))                    # (rows, 1)
    is0 = labels_ref[...] == 0        # labels are binary {0,1}; any other value acts as class 1
    picked = jnp.where(is0, lg0, lg1)
    wrow = jnp.where(is0, cw_ref[0], cw_ref[1])
    loss_ref[...] = jnp.sum(wrow * (lse - picked), keepdims=True)        # (1, 1) partial


def select_forward_pallas(pooled, class_logits, labels,
                          w1, b1, w2, b2, w3, b3, class_weight,
                          batch_tile=None):
    """Runs the select_classifier + weighted sum-CE loss on TPU via Pallas.

    batch_tile: batch items per grid step. Default = whole batch in one step.
    (For batch_tile < B, pick it so batch_tile is a multiple of 8 and
    batch_tile * S is a multiple of 128 for best MXU/vector-store utilization.)
    """
    B, S, R = class_logits.shape
    H = pooled.shape[-1]
    D1 = w1.shape[1]
    D2 = w2.shape[1]

    bt = B if batch_tile is None else batch_tile
    assert B % bt == 0, "batch must be divisible by batch_tile"
    nb = B // bt
    rows_t = bt * S

    w1p = w1[:H, :]                                  # pooled part of layer-1 weight
    w1c = w1[H:, :]                                  # class_logits part of layer-1 weight
    cls2d = class_logits.reshape(B * S, R)           # flatten (B,S) -> rows
    labels2d = labels.reshape(B * S, 1).astype(jnp.int32)
    b1r = b1.reshape(1, D1)
    b2r = b2.reshape(1, D2)
    b3r = b3.reshape(1, 2)
    cw = class_weight.reshape(2)                     # two scalars -> SMEM

    const2 = lambda i: (0, 0)                        # weights: fetched once (index never changes)

    logits2d, loss_parts = pl.pallas_call(
        _select_kernel,
        out_shape=(
            jax.ShapeDtypeStruct((B * S, 2), jnp.float32),
            jax.ShapeDtypeStruct((nb, 1), jnp.float32),
        ),
        grid_spec=pltpu.PrefetchScalarGridSpec(
            num_scalar_prefetch=0,
            grid=(nb,),
            in_specs=[
                pl.BlockSpec((bt, H), lambda i: (i, 0)),        # pooled
                pl.BlockSpec((rows_t, R), lambda i: (i, 0)),    # class_logits (flattened rows)
                pl.BlockSpec((rows_t, 1), lambda i: (i, 0)),    # labels (flattened rows)
                pl.BlockSpec(memory_space=pltpu.MemorySpace.SMEM),  # class weights (2 scalars)
                pl.BlockSpec((H, D1), const2),                  # W1 (pooled part)
                pl.BlockSpec((R, D1), const2),                  # W1 (class part)
                pl.BlockSpec((1, D1), const2),                  # b1
                pl.BlockSpec((D1, D2), const2),                 # W2
                pl.BlockSpec((1, D2), const2),                  # b2
                pl.BlockSpec((D2, 2), const2),                  # W3
                pl.BlockSpec((1, 2), const2),                   # b3
            ],
            out_specs=(
                pl.BlockSpec((rows_t, 2), lambda i: (i, 0)),    # logits_for_select (flat rows)
                pl.BlockSpec((1, 1), lambda i: (i, 0)),         # per-step partial loss
            ),
        ),
        compiler_params=pltpu.CompilerParams(
            dimension_semantics=("parallel",)),     # no cross-step dependency -> megacore-safe
    )(pooled, cls2d, labels2d, cw,
      w1p, w1c, b1r, w2, b2r, w3, b3r)

    select_loss = jnp.sum(loss_parts)
    return select_loss, logits2d.reshape(B, S, 2)


def reference_forward(pooled, class_logits, labels, w1, b1, w2, b2, w3, b3, class_weight):
    """Plain-JAX reference matching the PyTorch module semantics."""
    B, S, _ = class_logits.shape
    x = jnp.concatenate(
        [jnp.broadcast_to(pooled[:, None, :], (B, S, pooled.shape[-1])), class_logits], axis=-1)
    h1 = jax.nn.relu(x @ w1 + b1)
    h2 = jax.nn.relu(h1 @ w2 + b2)
    lg = h2 @ w3 + b3
    flat = lg.reshape(-1, 2)
    lab = labels.reshape(-1)
    logp = jax.nn.log_softmax(flat, axis=-1)
    nll = -jnp.take_along_axis(logp, lab[:, None], axis=-1)[:, 0]
    loss = jnp.sum(class_weight[lab] * nll)
    return loss, lg


if __name__ == "__main__":
    # Small, module-consistent shapes.
    B = 2          # batch
    L = 16         # token sequence length
    S = 8          # number of candidate spans (class_logits.shape[1])
    H = 32         # config.hidden_size
    R = 8          # num_rel_label
    D1 = D2 = 32   # hidden_dim_for_select == hidden_dim_for_NER
    VOCAB = 100

    key = jax.random.PRNGKey(0)
    ks = jax.random.split(key, 12)

    # ---- deterministic "weights" (synthetic, not a checkpoint) ----
    word_emb = 0.1 * jax.random.normal(ks[0], (VOCAB, H), jnp.float32)
    pooler_w = 0.1 * jax.random.normal(ks[1], (H, H), jnp.float32)
    pooler_b = 0.1 * jax.random.normal(ks[2], (H,), jnp.float32)
    w1 = 0.1 * jax.random.normal(ks[3], (H + R, D1), jnp.float32)
    b1 = 0.1 * jax.random.normal(ks[4], (D1,), jnp.float32)
    w2 = 0.1 * jax.random.normal(ks[5], (D1, D2), jnp.float32)
    b2 = 0.1 * jax.random.normal(ks[6], (D2,), jnp.float32)
    w3 = 0.1 * jax.random.normal(ks[7], (D2, 2), jnp.float32)
    b3 = 0.1 * jax.random.normal(ks[8], (2,), jnp.float32)
    # Select_none_span_reweighting_in_BF != 0 path: w[0] = reweight, w[1] = 1.0
    class_weight = jnp.array([0.5, 1.0], jnp.float32)

    # ---- deterministic example inputs ----
    batch_tokens = jax.random.randint(ks[9], (B, L), 0, VOCAB, jnp.int32)
    batch_tokens_attention_mask = jnp.ones((B, L), jnp.int32)
    batch_spans = jnp.stack(
        [jnp.zeros((B, S), jnp.int32), jnp.ones((B, S), jnp.int32), jnp.ones((B, S), jnp.int32)],
        axis=-1)                                         # (B, S, 3) -- unused by returned logits
    batch_span_mask = jnp.ones((B, S), jnp.int32)        # unused by forward
    class_logits = jax.random.normal(ks[10], (B, S, R), jnp.float32)
    batch_class_select_labels = jax.random.randint(ks[11], (B, S), 0, 2, jnp.int32)

    # ---- BERT pooled_output stand-in (plain JAX glue; see TODO above) ----
    emb = word_emb[batch_tokens]                                          # (B, L, H)
    maskf = batch_tokens_attention_mask.astype(jnp.float32)[..., None]
    seq_mean = (emb * maskf).sum(axis=1) / jnp.maximum(maskf.sum(axis=1), 1.0)
    pooled_output = jnp.tanh(seq_mean @ pooler_w + pooler_b)              # (B, H)

    # ---- Pallas kernel forward ----
    select_loss, logits_for_select = select_forward_pallas(
        pooled_output, class_logits, batch_class_select_labels,
        w1, b1, w2, b2, w3, b3, class_weight)
    select_loss = jax.block_until_ready(select_loss)
    logits_for_select = jax.block_until_ready(logits_for_select)

    # ---- reference check ----
    ref_loss, ref_logits = reference_forward(
        pooled_output, class_logits, batch_class_select_labels,
        w1, b1, w2, b2, w3, b3, class_weight)
    assert np.allclose(np.asarray(logits_for_select), np.asarray(ref_logits),
                       rtol=1e-3, atol=1e-3)
    assert np.allclose(float(select_loss), float(ref_loss), rtol=1e-3, atol=1e-3)

    print("KERNEL_OK")
</pallas_src>

<mosaic_0001>
module attributes {stable_mosaic.version = 11 : i64} {
  func.func @_select_kernel(%arg0: i32, %arg1: memref<2x32xf32, #tpu.memory_space<vmem>>, %arg2: memref<16x8xf32, #tpu.memory_space<vmem>>, %arg3: memref<16x1xi32, #tpu.memory_space<vmem>>, %arg4: memref<2xf32, #tpu.memory_space<smem>>, %arg5: memref<32x32xf32, #tpu.memory_space<vmem>>, %arg6: memref<8x32xf32, #tpu.memory_space<vmem>>, %arg7: memref<1x32xf32, #tpu.memory_space<vmem>>, %arg8: memref<32x32xf32, #tpu.memory_space<vmem>>, %arg9: memref<1x32xf32, #tpu.memory_space<vmem>>, %arg10: memref<32x2xf32, #tpu.memory_space<vmem>>, %arg11: memref<1x2xf32, #tpu.memory_space<vmem>>, %arg12: memref<16x2xf32, #tpu.memory_space<vmem>>, %arg13: memref<1x1xf32, #tpu.memory_space<vmem>>) attributes {dimension_semantics = [#tpu.dimension_semantics<parallel>], iteration_bounds = array<i64: 1>, scalar_prefetch = 0 : i64, scratch_operands = 0 : i64, tpu.core_type = #tpu.core_type<tc>, window_params = [{transform_indices = @transform_0, window_bounds = array<i64: 2, 32>}, {transform_indices = @transform_1, window_bounds = array<i64: 16, 8>}, {transform_indices = @transform_2, window_bounds = array<i64: 16, 1>}, {transform_indices = @transform_3, window_bounds = array<i64: 2>}, {pipeline_mode = #tpu.pipeline_mode<synchronous>, transform_indices = @transform_4, window_bounds = array<i64: 32, 32>}, {pipeline_mode = #tpu.pipeline_mode<synchronous>, transform_indices = @transform_5, window_bounds = array<i64: 8, 32>}, {pipeline_mode = #tpu.pipeline_mode<synchronous>, transform_indices = @transform_6, window_bounds = array<i64: 1, 32>}, {pipeline_mode = #tpu.pipeline_mode<synchronous>, transform_indices = @transform_7, window_bounds = array<i64: 32, 32>}, {pipeline_mode = #tpu.pipeline_mode<synchronous>, transform_indices = @transform_8, window_bounds = array<i64: 1, 32>}, {pipeline_mode = #tpu.pipeline_mode<synchronous>, transform_indices = @transform_9, window_bounds = array<i64: 32, 2>}, {pipeline_mode = #tpu.pipeline_mode<synchronous>, transform_indices = @transform_10, window_bounds = array<i64: 1, 2>}, {transform_indices = @transform_11, window_bounds = array<i64: 16, 2>}, {transform_indices = @transform_12, window_bounds = array<i64: 1, 1>}]} {
    %c0 = arith.constant 0 : index
    %c0_0 = arith.constant 0 : index
    %0 = vector.load %arg1[%c0, %c0_0] : memref<2x32xf32, #tpu.memory_space<vmem>>, vector<2x32xf32>
    %c0_1 = arith.constant 0 : index
    %c0_2 = arith.constant 0 : index
    %1 = vector.load %arg5[%c0_1, %c0_2] : memref<32x32xf32, #tpu.memory_space<vmem>>, vector<32x32xf32>
    %cst = arith.constant dense<0.000000e+00> : vector<2x32xf32>
    %2 = tpu.matmul %0, %1, %cst {dimension_numbers = #tpu.dot_dimension_numbers<[1], [0], [0], [1], [0, 0, 1, 1], [], []>} : vector<2x32xf32>, vector<32x32xf32>, vector<2x32xf32> -> vector<2x32xf32>
    %c0_3 = arith.constant 0 : index
    %c0_4 = arith.constant 0 : index
    %3 = vector.load %arg2[%c0_3, %c0_4] : memref<16x8xf32, #tpu.memory_space<vmem>>, vector<16x8xf32>
    %c0_5 = arith.constant 0 : index
    %c0_6 = arith.constant 0 : index
    %4 = vector.load %arg6[%c0_5, %c0_6] : memref<8x32xf32, #tpu.memory_space<vmem>>, vector<8x32xf32>
    %cst_7 = arith.constant dense<0.000000e+00> : vector<16x32xf32>
    %5 = tpu.matmul %3, %4, %cst_7 {dimension_numbers = #tpu.dot_dimension_numbers<[1], [0], [0], [1], [0, 0, 1, 1], [], []>} : vector<16x8xf32>, vector<8x32xf32>, vector<16x32xf32> -> vector<16x32xf32>
    %6 = vector.shape_cast %5 : vector<16x32xf32> to vector<2x8x32xf32>
    %7 = vector.shape_cast %2 : vector<2x32xf32> to vector<2x1x32xf32>
    %8 = vector.broadcast %7 : vector<2x1x32xf32> to vector<2x8x32xf32>
    %9 = arith.addf %6, %8 : vector<2x8x32xf32>
    %c0_8 = arith.constant 0 : index
    %c0_9 = arith.constant 0 : index
    %10 = vector.load %arg7[%c0_8, %c0_9] : memref<1x32xf32, #tpu.memory_space<vmem>>, vector<1x32xf32>
    %11 = vector.shape_cast %10 : vector<1x32xf32> to vector<1x1x32xf32>
    %12 = vector.broadcast %11 : vector<1x1x32xf32> to vector<2x8x32xf32>
    %13 = arith.addf %9, %12 : vector<2x8x32xf32>
    %cst_10 = arith.constant 0.000000e+00 : f32
    %14 = vector.broadcast %cst_10 : f32 to vector<2x8x32xf32>
    %15 = arith.maximumf %13, %14 : vector<2x8x32xf32>
    %16 = vector.shape_cast %15 : vector<2x8x32xf32> to vector<16x32xf32>
    %c0_11 = arith.constant 0 : index
    %c0_12 = arith.constant 0 : index
    %17 = vector.load %arg8[%c0_11, %c0_12] : memref<32x32xf32, #tpu.memory_space<vmem>>, vector<32x32xf32>
    %cst_13 = arith.constant dense<0.000000e+00> : vector<16x32xf32>
    %18 = tpu.matmul %16, %17, %cst_13 {dimension_numbers = #tpu.dot_dimension_numbers<[1], [0], [0], [1], [0, 0, 1, 1], [], []>} : vector<16x32xf32>, vector<32x32xf32>, vector<16x32xf32> -> vector<16x32xf32>
    %c0_14 = arith.constant 0 : index
    %c0_15 = arith.constant 0 : index
    %19 = vector.load %arg9[%c0_14, %c0_15] : memref<1x32xf32, #tpu.memory_space<vmem>>, vector<1x32xf32>
    %20 = vector.broadcast %19 : vector<1x32xf32> to vector<16x32xf32>
    %21 = arith.addf %18, %20 : vector<16x32xf32>
    %cst_16 = arith.constant 0.000000e+00 : f32
    %22 = vector.broadcast %cst_16 : f32 to vector<16x32xf32>
    %23 = arith.maximumf %21, %22 : vector<16x32xf32>
    %c0_17 = arith.constant 0 : index
    %c0_18 = arith.constant 0 : index
    %24 = vector.load %arg10[%c0_17, %c0_18] : memref<32x2xf32, #tpu.memory_space<vmem>>, vector<32x2xf32>
    %cst_19 = arith.constant dense<0.000000e+00> : vector<16x2xf32>
    %25 = tpu.matmul %23, %24, %cst_19 {dimension_numbers = #tpu.dot_dimension_numbers<[1], [0], [0], [1], [0, 0, 1, 1], [], []>} : vector<16x32xf32>, vector<32x2xf32>, vector<16x2xf32> -> vector<16x2xf32>
    %c0_20 = arith.constant 0 : index
    %c0_21 = arith.constant 0 : index
    %26 = vector.load %arg11[%c0_20, %c0_21] : memref<1x2xf32, #tpu.memory_space<vmem>>, vector<1x2xf32>
    %27 = vector.broadcast %26 : vector<1x2xf32> to vector<16x2xf32>
    %28 = arith.addf %25, %27 : vector<16x2xf32>
    %c0_22 = arith.constant 0 : index
    %c0_23 = arith.constant 0 : index
    %29 = vector.load %arg12[%c0_22, %c0_23] : memref<16x2xf32, #tpu.memory_space<vmem>>, vector<16x2xf32>
    tpu.vector_store %arg12[%c0_22, %c0_23], %28 {strides = array<i32>} : memref<16x2xf32, #tpu.memory_space<vmem>>, vector<16x2xf32>,
    %30 = vector.extract_strided_slice %28 {offsets = [0, 0], sizes = [16, 1], strides = [1, 1]} : vector<16x2xf32> to vector<16x1xf32>
    %31 = vector.extract_strided_slice %28 {offsets = [0, 1], sizes = [16, 1], strides = [1, 1]} : vector<16x2xf32> to vector<16x1xf32>
    %32 = arith.maximumf %30, %31 : vector<16x1xf32>
    %33 = arith.subf %30, %31 : vector<16x1xf32>
    %34 = math.absf %33 : vector<16x1xf32>
    %cst_24 = arith.constant 0.000000e+00 : f32
    %35 = vector.broadcast %cst_24 : f32 to vector<16x1xf32>
    %36 = arith.subf %35, %34 : vector<16x1xf32>
    %37 = math.exp %36 : vector<16x1xf32>
    %38 = math.log1p %37 : vector<16x1xf32>
    %39 = arith.addf %32, %38 : vector<16x1xf32>
    %c0_25 = arith.constant 0 : index
    %c0_26 = arith.constant 0 : index
    %40 = vector.load %arg3[%c0_25, %c0_26] : memref<16x1xi32, #tpu.memory_space<vmem>>, vector<16x1xi32>
    %c0_i32 = arith.constant 0 : i32
    %41 = vector.broadcast %c0_i32 : i32 to vector<16x1xi32>
    %42 = arith.cmpi eq, %40, %41 : vector<16x1xi32>
    %43 = arith.select %42, %30, %31 : vector<16x1xi1>, vector<16x1xf32>
    %c0_27 = arith.constant 0 : index
    %44 = memref.load %arg4[%c0_27] : memref<2xf32, #tpu.memory_space<smem>>
    %c1 = arith.constant 1 : index
    %45 = memref.load %arg4[%c1] : memref<2xf32, #tpu.memory_space<smem>>
    %46 = vector.broadcast %44 : f32 to vector<16x1xf32>
    %47 = vector.broadcast %45 : f32 to vector<16x1xf32>
    %48 = arith.select %42, %46, %47 : vector<16x1xi1>, vector<16x1xf32>
    %49 = arith.subf %39, %43 : vector<16x1xf32>
    %50 = arith.mulf %48, %49 : vector<16x1xf32>
    %51 = vector.shape_cast %50 : vector<16x1xf32> to vector<1x16x1xf32>
    %cst_28 = arith.constant dense<0.000000e+00> : vector<1xf32>
    %52 = vector.multi_reduction <add>, %51, %cst_28 [1, 2] : vector<1x16x1xf32> to vector<1xf32>
    %53 = vector.shape_cast %52 : vector<1xf32> to vector<1x1x1xf32>
    %54 = vector.extract %53[0, 0, 0] : f32 from vector<1x1x1xf32>
    %55 = vector.broadcast %54 : f32 to vector<1x1xf32>
    %c0_29 = arith.constant 0 : index
    %c0_30 = arith.constant 0 : index
    %56 = vector.load %arg13[%c0_29, %c0_30] : memref<1x1xf32, #tpu.memory_space<vmem>>, vector<1x1xf32>
    tpu.vector_store %arg13[%c0_29, %c0_30], %55 {strides = array<i32>} : memref<1x1xf32, #tpu.memory_space<vmem>>, vector<1x1xf32>,
    return
  }
  func.func @transform_0(%arg0: i32) -> (i32, i32) {
    %c0_i32 = arith.constant 0 : i32
    %c0_i32_0 = arith.constant 0 : i32
    return %arg0, %c0_i32 : i32, i32
  }
  func.func @transform_1(%arg0: i32) -> (i32, i32) {
    %c0_i32 = arith.constant 0 : i32
    %c0_i32_0 = arith.constant 0 : i32
    return %arg0, %c0_i32 : i32, i32
  }
  func.func @transform_2(%arg0: i32) -> (i32, i32) {
    %c0_i32 = arith.constant 0 : i32
    %c0_i32_0 = arith.constant 0 : i32
    return %arg0, %c0_i32 : i32, i32
  }
  func.func @transform_3(%arg0: i32) -> i32 {
    %c0_i32 = arith.constant 0 : i32
    %c0_i32_0 = arith.constant 0 : i32
    return %c0_i32 : i32
  }
  func.func @transform_4(%arg0: i32) -> (i32, i32) {
    %c0_i32 = arith.constant 0 : i32
    %c0_i32_0 = arith.constant 0 : i32
    %c0_i32_1 = arith.constant 0 : i32
    return %c0_i32, %c0_i32_0 : i32, i32
  }
  func.func @transform_5(%arg0: i32) -> (i32, i32) {
    %c0_i32 = arith.constant 0 : i32
    %c0_i32_0 = arith.constant 0 : i32
    %c0_i32_1 = arith.constant 0 : i32
    return %c0_i32, %c0_i32_0 : i32, i32
  }
  func.func @transform_6(%arg0: i32) -> (i32, i32) {
    %c0_i32 = arith.constant 0 : i32
    %c0_i32_0 = arith.constant 0 : i32
    %c0_i32_1 = arith.constant 0 : i32
    return %c0_i32, %c0_i32_0 : i32, i32
  }
  func.func @transform_7(%arg0: i32) -> (i32, i32) {
    %c0_i32 = arith.constant 0 : i32
    %c0_i32_0 = arith.constant 0 : i32
    %c0_i32_1 = arith.constant 0 : i32
    return %c0_i32, %c0_i32_0 : i32, i32
  }
  func.func @transform_8(%arg0: i32) -> (i32, i32) {
    %c0_i32 = arith.constant 0 : i32
    %c0_i32_0 = arith.constant 0 : i32
    %c0_i32_1 = arith.constant 0 : i32
    return %c0_i32, %c0_i32_0 : i32, i32
  }
  func.func @transform_9(%arg0: i32) -> (i32, i32) {
    %c0_i32 = arith.constant 0 : i32
    %c0_i32_0 = arith.constant 0 : i32
    %c0_i32_1 = arith.constant 0 : i32
    return %c0_i32, %c0_i32_0 : i32, i32
  }
  func.func @transform_10(%arg0: i32) -> (i32, i32) {
    %c0_i32 = arith.constant 0 : i32
    %c0_i32_0 = arith.constant 0 : i32
    %c0_i32_1 = arith.constant 0 : i32
    return %c0_i32, %c0_i32_0 : i32, i32
  }
  func.func @transform_11(%arg0: i32) -> (i32, i32) {
    %c0_i32 = arith.constant 0 : i32
    %c0_i32_0 = arith.constant 0 : i32
    return %arg0, %c0_i32 : i32, i32
  }
  func.func @transform_12(%arg0: i32) -> (i32, i32) {
    %c0_i32 = arith.constant 0 : i32
    %c0_i32_0 = arith.constant 0 : i32
    return %arg0, %c0_i32 : i32, i32
  }
}

</mosaic_0001>

<llo_original>
// kernel: tpu_custom_call.1
$region0: #{tpu_custom_call.1}
  #allocation0 [shape = 'u32[]', space=smem, size = 0x4, offset = 0x4, fixed_abs, tag = 'smem constant byte address 0x4 - core index']
  #allocation1 [shape = 'u32[144,128]{1,0:T(1,128)}', space=vmem, size = 0x12000, scoped, tag = 'internal scratch']
  %s0 = inlined_call_operand.vmem [shape: f32[2,32], index: 0, kind: input, shape index: {}]
  %s1 = inlined_call_operand.vmem [shape: f32[16,8], index: 1, kind: input, shape index: {}]
  %s2 = inlined_call_operand.vmem [shape: s32[16,1], index: 2, kind: input, shape index: {}]
  %s3 = inlined_call_operand.vmem [shape: f32[2], index: 3, kind: input, shape index: {}]
  %s4 = inlined_call_operand.vmem [shape: f32[32,32], index: 4, kind: input, shape index: {}]
  %s5 = inlined_call_operand.vmem [shape: f32[8,32], index: 5, kind: input, shape index: {}]
  %s6 = inlined_call_operand.vmem [shape: f32[1,32], index: 6, kind: input, shape index: {}]
  %s7 = inlined_call_operand.vmem [shape: f32[32,32], index: 7, kind: input, shape index: {}]
  %s8 = inlined_call_operand.vmem [shape: f32[1,32], index: 8, kind: input, shape index: {}]
  %s9 = inlined_call_operand.vmem [shape: f32[32,2], index: 9, kind: input, shape index: {}]
  %s10 = inlined_call_operand.vmem [shape: f32[1,2], index: 10, kind: input, shape index: {}]
  %s11 = inlined_call_operand.vmem [shape: f32[16,2], index: 11, kind: output, shape index: {0}]
  %s12 = inlined_call_operand.hbm [shape: f32[1,1], index: 12, kind: output, shape index: {1}]
  %13 = xla_tuple %s11, %s12
  %s14 = sld [smem:[#allocation0]]
  $region66: #{tpu_custom_call.1} parent=0
    _
  %s16 = ssub.s32 1, %s14
  %s17 = scalar_select 0, %s16, %s14
  $region1: #{tpu_custom_call.1} parent=0
    #allocation2 [shape = 'u8[512]{0}', space=smem, size = 0x200, scoped, tag = 'input window, operand 3, single buffered']
    #allocation3 [shape = 's32[1]{0}', space=sflag, size = 0x4, scoped, tag = 'scoped memory for tpu_custom_call.1']
    #allocation4 [shape = 's32[1]{0}', space=sflag, size = 0x4, scoped, tag = 'scoped memory for tpu_custom_call.1']
    #allocation5 [shape = 'u8[512]{0}', space=vmem, size = 0x400, scoped, tag = 'output window, operand 1, single buffered']
    %18 = vsyncpa [#allocation4], 0
    %19 = vsyncpa [#allocation3], 0
    // Predicated region
    $region2: #{tpu_custom_call.1} parent=1 // pred_check
      _
    $region3: #{tpu_custom_call.1} parent=1 // pred_check_branch
      %21 = sbr.rel (0) target = $region5
    $region4: #{tpu_custom_call.1} parent=1 // pred_region
      _
    $region5: #{tpu_custom_call.1} parent=1 // pred_fallthru
      _
    // Predicated region
    $region6: #{tpu_custom_call.1} parent=1 // pred_check
      _
    $region7: #{tpu_custom_call.1} parent=1 // pred_check_branch
      %23 = sbr.rel (0) target = $region9
    $region8: #{tpu_custom_call.1} parent=1 // pred_region
      _
    $region9: #{tpu_custom_call.1} parent=1 // pred_fallthru
      _
    // Predicated region
    $region10: #{tpu_custom_call.1} parent=1 // pred_check
      _
    $region11: #{tpu_custom_call.1} parent=1 // pred_check_branch
      %25 = sbr.rel (0) target = $region13
    $region12: #{tpu_custom_call.1} parent=1 // pred_region
      _
    $region13: #{tpu_custom_call.1} parent=1 // pred_fallthru
      _
    // Predicated region
    $region14: #{tpu_custom_call.1} parent=1 // pred_check
      _
    $region15: #{tpu_custom_call.1} parent=1 // pred_check_branch
      %27 = sbr.rel (0) target = $region17
    $region16: #{tpu_custom_call.1} parent=1 // pred_region
      %s29 = ssub.s32 16, 16
      %30 = vsyncadd [#allocation4], %s29
      %s32 = sshll.u32 %s3, 4
      %s33 = int_to_ptr.vmem [resolvable:$true] %s32
      %35 = dma.vmem_to_smem %s33, 16, [#allocation2], [#allocation4]
    $region17: #{tpu_custom_call.1} parent=1 // pred_fallthru
      _
    // Predicated region
    $region18: #{tpu_custom_call.1} parent=1 // pred_check
      _
    $region19: #{tpu_custom_call.1} parent=1 // pred_check_branch
      %37 = sbr.rel (0) target = $region21
    $region20: #{tpu_custom_call.1} parent=1 // pred_region
      _
    $region21: #{tpu_custom_call.1} parent=1 // pred_fallthru
      _
    // Predicated region
    $region22: #{tpu_custom_call.1} parent=1 // pred_check
      _
    $region23: #{tpu_custom_call.1} parent=1 // pred_check_branch
      %39 = sbr.rel (0) target = $region25
    $region24: #{tpu_custom_call.1} parent=1 // pred_region
      _
    $region25: #{tpu_custom_call.1} parent=1 // pred_fallthru
      _
    // Predicated region
    $region26: #{tpu_custom_call.1} parent=1 // pred_check
      _
    $region27: #{tpu_custom_call.1} parent=1 // pred_check_branch
      %41 = sbr.rel (0) target = $region29
    $region28: #{tpu_custom_call.1} parent=1 // pred_region
      _
    $region29: #{tpu_custom_call.1} parent=1 // pred_fallthru
      _
    // Predicated region
    $region30: #{tpu_custom_call.1} parent=1 // pred_check
      _
    $region31: #{tpu_custom_call.1} parent=1 // pred_check_branch
      %43 = sbr.rel (0) target = $region33
    $region32: #{tpu_custom_call.1} parent=1 // pred_region
      _
    $region33: #{tpu_custom_call.1} parent=1 // pred_fallthru
      _
    // Predicated region
    $region34: #{tpu_custom_call.1} parent=1 // pred_check
      _
    $region35: #{tpu_custom_call.1} parent=1 // pred_check_branch
      %45 = sbr.rel (0) target = $region37
    $region36: #{tpu_custom_call.1} parent=1 // pred_region
      _
    $region37: #{tpu_custom_call.1} parent=1 // pred_fallthru
      _
    // Predicated region
    $region38: #{tpu_custom_call.1} parent=1 // pred_check
      _
    $region39: #{tpu_custom_call.1} parent=1 // pred_check_branch
      %47 = sbr.rel (0) target = $region41
    $region40: #{tpu_custom_call.1} parent=1 // pred_region
      _
    $region41: #{tpu_custom_call.1} parent=1 // pred_fallthru
      _
    // Predicated region
    $region42: #{tpu_custom_call.1} parent=1 // pred_check
      _
    $region43: #{tpu_custom_call.1} parent=1 // pred_check_branch
      %49 = sbr.rel (0) target = $region45
    $region44: #{tpu_custom_call.1} parent=1 // pred_region
      _
    $region45: #{tpu_custom_call.1} parent=1 // pred_fallthru
      _
    // Predicated region
    $region46: #{tpu_custom_call.1} parent=1 // pred_check
      _
    $region47: #{tpu_custom_call.1} parent=1 // pred_check_branch
      %51 = sbr.rel (0) target = $region49
    $region48: #{tpu_custom_call.1} parent=1 // pred_region
      %52 = dma.done [#allocation4], 16
    $region49: #{tpu_custom_call.1} parent=1 // pred_fallthru
      _
    %53 = sfence
    %v54 = vld [vmem:[%s0] sm:$0x3]
    %v55 = vld [vmem:[%s4] sm:$0xff]
    %v56 = vld [vmem:[%s4 + $0x8] sm:$0xff]
    %v57 = vld [vmem:[%s4 + $0x10] sm:$0xff]
    %v58 = vld [vmem:[%s4 + $0x18] sm:$0xff]
    %vm59 = vcmask 261120
    %v61 = vsel %vm59, %v54, 0
    %63 = vmatprep.subr.mxu0 0.0
    %64 = vmatpush1.msra.mxu0 0.0
    %65 = vmatprep.subr.mxu0 0.0
    %66 = vmatpush1.msra.mxu0 0.0
    %67 = vmatprep.subr.mxu0 0.0
    %68 = vmatpush1.msra.mxu0 0.0
    %69 = vmatprep.subr.mxu0 0.0
    %70 = vmatpush1.msra.mxu0 0.0
    %71 = vmatprep.subr.mxu0 0.0
    %72 = vmatpush1.msra.mxu0 0.0
    %73 = vmatprep.subr.mxu0 0.0
    %74 = vmatpush1.msra.mxu0 0.0
    %75 = vmatprep.subr.mxu0 0.0
    %76 = vmatpush1.msra.mxu0 0.0
    %77 = vmatprep.subr.mxu0 0.0
    %78 = vmatpush1.msra.mxu0 0.0
    %79 = vmatprep.subr.mxu0 0.0
    %80 = vmatpush1.msra.mxu0 0.0
    %81 = vmatprep.subr.mxu0 0.0
    %82 = vmatpush1.msra.mxu0 0.0
    %83 = vmatprep.subr.mxu0 0.0
    %84 = vmatpush1.msra.mxu0 0.0
    %85 = vmatprep.subr.mxu0 0.0
    %86 = vmatpush1.msra.mxu0 0.0
    %87 = vmatprep.subr.mxu0 0.0
    %88 = vmatpush1.msra.mxu0 %v58
    %89 = vmatprep.subr.mxu0 0.0
    %90 = vmatpush1.msra.mxu0 %v57
    %91 = vmatprep.subr.mxu0 0.0
    %92 = vmatpush1.msra.mxu0 %v56
    %93 = vmatprep.subr.mxu0 0.0
    %94 = vmatpush1.msra.mxu0 %v55
    %95 = vmatprep.subr.mxu0 0.0
    %96 = vmatpush2.msra.mxu0 0.0
    %97 = vmatprep.subr.mxu0 0.0
    %98 = vmatpush2.msra.mxu0 0.0
    %99 = vmatprep.subr.mxu0 0.0
    %100 = vmatpush2.msra.mxu0 0.0
    %101 = vmatprep.subr.mxu0 0.0
    %102 = vmatpush2.msra.mxu0 0.0
    %103 = vmatprep.subr.mxu0 0.0
    %104 = vmatpush2.msra.mxu0 0.0
    %105 = vmatprep.subr.mxu0 0.0
    %106 = vmatpush2.msra.mxu0 0.0
    %107 = vmatprep.subr.mxu0 0.0
    %108 = vmatpush2.msra.mxu0 0.0
    %109 = vmatprep.subr.mxu0 0.0
    %110 = vmatpush2.msra.mxu0 0.0
    %111 = vmatprep.subr.mxu0 0.0
    %112 = vmatpush2.msra.mxu0 0.0
    %113 = vmatprep.subr.mxu0 0.0
    %114 = vmatpush2.msra.mxu0 0.0
    %115 = vmatprep.subr.mxu0 0.0
    %116 = vmatpush2.msra.mxu0 0.0
    %117 = vmatprep.subr.mxu0 0.0
    %118 = vmatpush2.msra.mxu0 0.0
    %119 = vmatprep.subr.mxu0 0.0
    %120 = vmatpush2.msra.mxu0 0.0
    %121 = vmatprep.subr.mxu0 0.0
    %122 = vmatpush2.msra.mxu0 0.0
    %123 = vmatprep.subr.mxu0 0.0
    %124 = vmatpush2.msra.mxu0 0.0
    %125 = vmatprep.subr.mxu0 0.0
    %126 = vmatpush2.msra.mxu0 0.0
    %127 = vmatprep.mubr.f32.mxu0 0.0
    %128 = vmatmul.mubr.f32.gmra.mxu0 %v61
    %v129 = vpop.f32.mrf.mxu0
    %v130 = vadd.f32 0.0, %v129
    %v131 = vpop.f32.mrf.mxu0
    %132 = vdwg.mxu0
    %v133 = vld [vmem:[%s1] sm:$0xff]
    %v134 = vld [vmem:[%s1 + $0x8] sm:$0xff]
    %v135 = vld [vmem:[%s5] sm:$0xff]
    %vm136 = vcmask 64512
    %v138 = vsel %vm136, %v133, 0
    %v141 = vsel %vm136, %v134, 0
    %143 = vmatprep.subr.mxu0 0.0
    %144 = vmatpush1.msra.mxu0 0.0
    %145 = vmatprep.subr.mxu0 0.0
    %146 = vmatpush1.msra.mxu0 0.0
    %147 = vmatprep.subr.mxu0 0.0
    %148 = vmatpush1.msra.mxu0 0.0
    %149 = vmatprep.subr.mxu0 0.0
    %150 = vmatpush1.msra.mxu0 0.0
    %151 = vmatprep.subr.mxu0 0.0
    %152 = vmatpush1.msra.mxu0 0.0
    %153 = vmatprep.subr.mxu0 0.0
    %154 = vmatpush1.msra.mxu0 0.0
    %155 = vmatprep.subr.mxu0 0.0
    %156 = vmatpush1.msra.mxu0 0.0
    %157 = vmatprep.subr.mxu0 0.0
    %158 = vmatpush1.msra.mxu0 0.0
    %159 = vmatprep.subr.mxu0 0.0
    %160 = vmatpush1.msra.mxu0 0.0
    %161 = vmatprep.subr.mxu0 0.0
    %162 = vmatpush1.msra.mxu0 0.0
    %163 = vmatprep.subr.mxu0 0.0
    %164 = vmatpush1.msra.mxu0 0.0
    %165 = vmatprep.subr.mxu0 0.0
    %166 = vmatpush1.msra.mxu0 0.0
    %167 = vmatprep.subr.mxu0 0.0
    %168 = vmatpush1.msra.mxu0 0.0
    %169 = vmatprep.subr.mxu0 0.0
    %170 = vmatpush1.msra.mxu0 0.0
    %171 = vmatprep.subr.mxu0 0.0
    %172 = vmatpush1.msra.mxu0 0.0
    %173 = vmatprep.subr.mxu0 0.0
    %174 = vmatpush1.msra.mxu0 %v135
    %175 = vmatprep.subr.mxu0 0.0
    %176 = vmatpush2.msra.mxu0 0.0
    %177 = vmatprep.subr.mxu0 0.0
    %178 = vmatpush2.msra.mxu0 0.0
    %179 = vmatprep.subr.mxu0 0.0
    %180 = vmatpush2.msra.mxu0 0.0
    %181 = vmatprep.subr.mxu0 0.0
    %182 = vmatpush2.msra.mxu0 0.0
    %183 = vmatprep.subr.mxu0 0.0
    %184 = vmatpush2.msra.mxu0 0.0
    %185 = vmatprep.subr.mxu0 0.0
    %186 = vmatpush2.msra.mxu0 0.0
    %187 = vmatprep.subr.mxu0 0.0
    %188 = vmatpush2.msra.mxu0 0.0
    %189 = vmatprep.subr.mxu0 0.0
    %190 = vmatpush2.msra.mxu0 0.0
    %191 = vmatprep.subr.mxu0 0.0
    %192 = vmatpush2.msra.mxu0 0.0
    %193 = vmatprep.subr.mxu0 0.0
    %194 = vmatpush2.msra.mxu0 0.0
    %195 = vmatprep.subr.mxu0 0.0
    %196 = vmatpush2.msra.mxu0 0.0
    %197 = vmatprep.subr.mxu0 0.0
    %198 = vmatpush2.msra.mxu0 0.0
    %199 = vmatprep.subr.mxu0 0.0
    %200 = vmatpush2.msra.mxu0 0.0
    %201 = vmatprep.subr.mxu0 0.0
    %202 = vmatpush2.msra.mxu0 0.0
    %203 = vmatprep.subr.mxu0 0.0
    %204 = vmatpush2.msra.mxu0 0.0
    %205 = vmatprep.subr.mxu0 0.0
    %206 = vmatpush2.msra.mxu0 0.0
    %207 = vmatprep.mubr.f32.mxu0 0.0
    %208 = vmatmul.mubr.f32.gmra.mxu0 %v138
    %v209 = vpop.f32.mrf.mxu0
    %v210 = vadd.f32 0.0, %v209
    %v211 = vpop.f32.mrf.mxu0
    %212 = vmatprep.mubr.f32.mxu0 0.0
    %213 = vmatmul.mubr.f32.gmra.mxu0 %v141
    %v214 = vpop.f32.mrf.mxu0
    %v215 = vadd.f32 0.0, %v214
    %v216 = vpop.f32.mrf.mxu0
    %217 = vdwg.mxu0
    %v220 = vunpack.c.l.s4 1966171168
    %v221 = vunpack.c.0.s8 %v220
    %v222 = vlaneseq
    %v223 = vshrl.u32 %v222, 7
    %v224 = vsub.s32 %v221, %v223
    %v225 = vrot.slane %v130, %v224
    %v226 = vcombine.high %v225, %v225
    %v228 = vunpack.c.l.s4 1966171168
    %v229 = vunpack.c.0.s8 %v228
    %v230 = vlaneseq
    %v231 = vshrl.u32 %v230, 7
    %v232 = vsub.s32 %v229, %v231
    %v233 = vrot.slane %v225, %v232
    %v235 = vunpack.c.l.s4 1966171168
    %v236 = vunpack.c.0.s8 %v235
    %v237 = vlaneseq
    %v238 = vshrl.u32 %v237, 7
    %v239 = vsub.s32 %v236, %v238
    %v240 = vrot.slane %v226, %v239
    %v241 = vlaneseq
    %v242 = vshrl.u32 %v241, 7
    %v243 = vsub.s32 0, %v242
    %v244 = vrot.slane %v233, %v243
    %v245 = vlaneseq
    %v246 = vshrl.u32 %v245, 7
    %v247 = vsub.s32 0, %v246
    %v248 = vrot.slane %v240, %v247
    %v251 = vadd.f32 %v210, %v244
    %v252 = vadd.f32 %v215, %v248
    %v253 = vld [vmem:[%s6] sm:$0x1]
    %v255 = vlaneseq
    %v256 = vshrl.u32 %v255, 7
    %v257 = vsub.s32 0, %v256
    %v258 = vrot.slane %v253, %v257
    %v260 = vadd.f32 %v251, %v258
    %v261 = vadd.f32 %v252, %v258
    %v262 = vmax.f32 %v260, 0.0
    %v263 = vmax.f32 %v261, 0.0
    %v264 = vld [vmem:[%s7] sm:$0xff]
    %v265 = vld [vmem:[%s7 + $0x8] sm:$0xff]
    %v266 = vld [vmem:[%s7 + $0x10] sm:$0xff]
    %v267 = vld [vmem:[%s7 + $0x18] sm:$0xff]
    %v268 = vld [vmem:[%s8] sm:$0x1]
    %v270 = vlaneseq
    %v271 = vshrl.u32 %v270, 7
    %v272 = vsub.s32 0, %v271
    %v273 = vrot.slane %v268, %v272
    %v276 = vsel %vm59, %v262, 0
    %v279 = vsel %vm59, %v263, 0
    %281 = vmatprep.subr.mxu0 0.0
    %282 = vmatpush1.msra.mxu0 0.0
    %283 = vmatprep.subr.mxu0 0.0
    %284 = vmatpush1.msra.mxu0 0.0
    %285 = vmatprep.subr.mxu0 0.0
    %286 = vmatpush1.msra.mxu0 0.0
    %287 = vmatprep.subr.mxu0 0.0
    %288 = vmatpush1.msra.mxu0 0.0
    %289 = vmatprep.subr.mxu0 0.0
    %290 = vmatpush1.msra.mxu0 0.0
    %291 = vmatprep.subr.mxu0 0.0
    %292 = vmatpush1.msra.mxu0 0.0
    %293 = vmatprep.subr.mxu0 0.0
    %294 = vmatpush1.msra.mxu0 0.0
    %295 = vmatprep.subr.mxu0 0.0
    %296 = vmatpush1.msra.mxu0 0.0
    %297 = vmatprep.subr.mxu0 0.0
    %298 = vmatpush1.msra.mxu0 0.0
    %299 = vmatprep.subr.mxu0 0.0
    %300 = vmatpush1.msra.mxu0 0.0
    %301 = vmatprep.subr.mxu0 0.0
    %302 = vmatpush1.msra.mxu0 0.0
    %303 = vmatprep.subr.mxu0 0.0
    %304 = vmatpush1.msra.mxu0 0.0
    %305 = vmatprep.subr.mxu0 0.0
    %306 = vmatpush1.msra.mxu0 %v267
    %307 = vmatprep.subr.mxu0 0.0
    %308 = vmatpush1.msra.mxu0 %v266
    %309 = vmatprep.subr.mxu0 0.0
    %310 = vmatpush1.msra.mxu0 %v265
    %311 = vmatprep.subr.mxu0 0.0
    %312 = vmatpush1.msra.mxu0 %v264
    %313 = vmatprep.subr.mxu0 0.0
    %314 = vmatpush2.msra.mxu0 0.0
    %315 = vmatprep.subr.mxu0 0.0
    %316 = vmatpush2.msra.mxu0 0.0
    %317 = vmatprep.subr.mxu0 0.0
    %318 = vmatpush2.msra.mxu0 0.0
    %319 = vmatprep.subr.mxu0 0.0
    %320 = vmatpush2.msra.mxu0 0.0
    %321 = vmatprep.subr.mxu0 0.0
    %322 = vmatpush2.msra.mxu0 0.0
    %323 = vmatprep.subr.mxu0 0.0
    %324 = vmatpush2.msra.mxu0 0.0
    %325 = vmatprep.subr.mxu0 0.0
    %326 = vmatpush2.msra.mxu0 0.0
    %327 = vmatprep.subr.mxu0 0.0
    %328 = vmatpush2.msra.mxu0 0.0
    %329 = vmatprep.subr.mxu0 0.0
    %330 = vmatpush2.msra.mxu0 0.0
    %331 = vmatprep.subr.mxu0 0.0
    %332 = vmatpush2.msra.mxu0 0.0
    %333 = vmatprep.subr.mxu0 0.0
    %334 = vmatpush2.msra.mxu0 0.0
    %335 = vmatprep.subr.mxu0 0.0
    %336 = vmatpush2.msra.mxu0 0.0
    %337 = vmatprep.subr.mxu0 0.0
    %338 = vmatpush2.msra.mxu0 0.0
    %339 = vmatprep.subr.mxu0 0.0
    %340 = vmatpush2.msra.mxu0 0.0
    %341 = vmatprep.subr.mxu0 0.0
    %342 = vmatpush2.msra.mxu0 0.0
    %343 = vmatprep.subr.mxu0 0.0
    %344 = vmatpush2.msra.mxu0 0.0
    %345 = vmatprep.mubr.f32.mxu0 0.0
    %346 = vmatmul.mubr.f32.gmra.mxu0 %v276
    %v347 = vpop.f32.mrf.mxu0
    %v348 = vadd.f32 %v273, %v347
    %v349 = vpop.f32.mrf.mxu0
    %350 = vmatprep.mubr.f32.mxu0 0.0
    %351 = vmatmul.mubr.f32.gmra.mxu0 %v279
    %v352 = vpop.f32.mrf.mxu0
    %v353 = vadd.f32 %v273, %v352
    %v354 = vpop.f32.mrf.mxu0
    %355 = vdwg.mxu0
    %v356 = vmax.f32 %v348, 0.0
    %v357 = vmax.f32 %v353, 0.0
    %v358 = vld [vmem:[%s9] sm:$0xff]
    %v359 = vld [vmem:[%s9 + $0x8] sm:$0xff]
    %v360 = vld [vmem:[%s9 + $0x10] sm:$0xff]
    %v361 = vld [vmem:[%s9 + $0x18] sm:$0xff]
    %v362 = vld [vmem:[%s10] sm:$0x1]
    %v364 = vlaneseq
    %v365 = vshrl.u32 %v364, 7
    %v366 = vsub.s32 0, %v365
    %v367 = vrot.slane %v362, %v366
    %v370 = vsel %vm59, %v356, 0
    %v373 = vsel %vm59, %v357, 0
    %375 = vmatprep.subr.mxu0 0.0
    %376 = vmatpush1.msra.mxu0 0.0
    %377 = vmatprep.subr.mxu0 0.0
    %378 = vmatpush1.msra.mxu0 0.0
    %379 = vmatprep.subr.mxu0 0.0
    %380 = vmatpush1.msra.mxu0 0.0
    %381 = vmatprep.subr.mxu0 0.0
    %382 = vmatpush1.msra.mxu0 0.0
    %383 = vmatprep.subr.mxu0 0.0
    %384 = vmatpush1.msra.mxu0 0.0
    %385 = vmatprep.subr.mxu0 0.0
    %386 = vmatpush1.msra.mxu0 0.0
    %387 = vmatprep.subr.mxu0 0.0
    %388 = vmatpush1.msra.mxu0 0.0
    %389 = vmatprep.subr.mxu0 0.0
    %390 = vmatpush1.msra.mxu0 0.0
    %391 = vmatprep.subr.mxu0 0.0
    %392 = vmatpush1.msra.mxu0 0.0
    %393 = vmatprep.subr.mxu0 0.0
    %394 = vmatpush1.msra.mxu0 0.0
    %395 = vmatprep.subr.mxu0 0.0
    %396 = vmatpush1.msra.mxu0 0.0
    %397 = vmatprep.subr.mxu0 0.0
    %398 = vmatpush1.msra.mxu0 0.0
    %399 = vmatprep.subr.mxu0 0.0
    %400 = vmatpush1.msra.mxu0 %v361
    %401 = vmatprep.subr.mxu0 0.0
    %402 = vmatpush1.msra.mxu0 %v360
    %403 = vmatprep.subr.mxu0 0.0
    %404 = vmatpush1.msra.mxu0 %v359
    %405 = vmatprep.subr.mxu0 0.0
    %406 = vmatpush1.msra.mxu0 %v358
    %407 = vmatprep.subr.mxu0 0.0
    %408 = vmatpush2.msra.mxu0 0.0
    %409 = vmatprep.subr.mxu0 0.0
    %410 = vmatpush2.msra.mxu0 0.0
    %411 = vmatprep.subr.mxu0 0.0
    %412 = vmatpush2.msra.mxu0 0.0
    %413 = vmatprep.subr.mxu0 0.0
    %414 = vmatpush2.msra.mxu0 0.0
    %415 = vmatprep.subr.mxu0 0.0
    %416 = vmatpush2.msra.mxu0 0.0
    %417 = vmatprep.subr.mxu0 0.0
    %418 = vmatpush2.msra.mxu0 0.0
    %419 = vmatprep.subr.mxu0 0.0
    %420 = vmatpush2.msra.mxu0 0.0
    %421 = vmatprep.subr.mxu0 0.0
    %422 = vmatpush2.msra.mxu0 0.0
    %423 = vmatprep.subr.mxu0 0.0
    %424 = vmatpush2.msra.mxu0 0.0
    %425 = vmatprep.subr.mxu0 0.0
    %426 = vmatpush2.msra.mxu0 0.0
    %427 = vmatprep.subr.mxu0 0.0
    %428 = vmatpush2.msra.mxu0 0.0
    %429 = vmatprep.subr.mxu0 0.0
    %430 = vmatpush2.msra.mxu0 0.0
    %431 = vmatprep.subr.mxu0 0.0
    %432 = vmatpush2.msra.mxu0 0.0
    %433 = vmatprep.subr.mxu0 0.0
    %434 = vmatpush2.msra.mxu0 0.0
    %435 = vmatprep.subr.mxu0 0.0
    %436 = vmatpush2.msra.mxu0 0.0
    %437 = vmatprep.subr.mxu0 0.0
    %438 = vmatpush2.msra.mxu0 0.0
    %439 = vmatprep.mubr.f32.mxu0 0.0
    %440 = vmatmul.mubr.f32.gmra.mxu0 %v370
    %v441 = vpop.f32.mrf.mxu0
    %v442 = vadd.f32 %v367, %v441
    %v443 = vpop.f32.mrf.mxu0
    %444 = vmatprep.mubr.f32.mxu0 0.0
    %445 = vmatmul.mubr.f32.gmra.mxu0 %v373
    %v446 = vpop.f32.mrf.mxu0
    %v447 = vadd.f32 %v367, %v446
    %v448 = vpop.f32.mrf.mxu0
    %449 = vdwg.mxu0
    %vm450 = vcmask 15360
    %451 = vst.msk [vmem:[%s11] sm:$0xff] %vm450, %v442
    %452 = vst.msk [vmem:[%s11 + $0x8] sm:$0xff] %vm450, %v447
    %455 = vrot.lane.b32.xlu0 %v442, 127
    %v456 = vpop.permute.xlu0 %455
    %457 = vrot.lane.b32.xlu0 %v447, 127
    %v458 = vpop.permute.xlu0 %457
    %v461 = vmax.f32 %v442, %v456
    %v462 = vmax.f32 %v447, %v458
    %v463 = vsub.f32 %v442, %v456
    %v464 = vsub.f32 %v447, %v458
    %v465 = vand.u32 2147483647, %v463
    %v466 = vand.u32 2147483647, %v464
    %v467 = vsub.f32 0.0, %v465
    %v468 = vsub.f32 0.0, %v466
    %v469 = vmul.f32 %v467, 1.442695
    %v470 = vpow.pop %v469
    %v471 = vmul.f32 %v468, 1.442695
    %v472 = vpow.pop %v471
    %v473 = vadd.f32 %v470, 1.0
    %v474 = vlog2.pop %v473
    %v475 = vmul.f32 %v474, 0.6931472
    %v476 = vmul.f32 -0.5, %v470
    %v477 = vadd.f32 %v476, 1.0
    %v478 = vmul.f32 %v477, %v470
    %v479 = vand.u32 2147483647, %v470
    %vm480 = vcmp.lt.f32.partialorder %v479, 0.0004427343
    %v481 = vsel %vm480, %v478, %v475
    %v482 = vadd.f32 %v472, 1.0
    %v483 = vlog2.pop %v482
    %v484 = vmul.f32 %v483, 0.6931472
    %v485 = vmul.f32 -0.5, %v472
    %v486 = vadd.f32 %v485, 1.0
    %v487 = vmul.f32 %v486, %v472
    %v488 = vand.u32 2147483647, %v472
    %vm489 = vcmp.lt.f32.partialorder %v488, 0.0004427343
    %v490 = vsel %vm489, %v487, %v484
    %v491 = vadd.f32 %v461, %v481
    %v492 = vadd.f32 %v462, %v490
    %v493 = vld [vmem:[%s2] sm:$0xff]
    %v494 = vld [vmem:[%s2 + $0x8] sm:$0xff]
    %vm495 = vcmp.eq.s32.totalorder %v493, 0
    %vm496 = vcmp.eq.s32.totalorder %v494, 0
    %v497 = vsel %vm495, %v442, %v456
    %v498 = vsel %vm496, %v447, %v458
    %s499 = sld [smem:[#allocation2]]
    %s500 = sld [smem:[#allocation2 + $0x1]]
    %v501 = vstv %s499
    %v502 = vstv %s500
    %v503 = vsel %vm495, %v501, %v502
    %v504 = vsel %vm496, %v501, %v502
    %v505 = vsub.f32 %v491, %v497
    %v506 = vsub.f32 %v492, %v498
    %v507 = vmul.f32 %v503, %v505
    %v508 = vmul.f32 %v504, %v506
    %vm509 = vcmask 7168
    %v510 = vsel %vm509, %v507, 0.0
    %v511 = vsel %vm509, %v508, 0.0
    %v512 = vadd.f32 %v510, %v511
    %513 = vadd.xlane.f32.xlu0 %v512
    %v514 = vpop.xlane.xlu0 %513
    %v515 = vrot.slane %v514, 4
    %v516 = vadd.f32 %v514, %v515
    %v517 = vrot.slane %v516, 2
    %v518 = vadd.f32 %v516, %v517
    %v519 = vrot.slane %v518, 1
    %v520 = vadd.f32 %v518, %v519
    %s521 = vtos %v520
    %v522 = vstv %s521
    %vm523 = vcmask 0
    %524 = vst.msk [vmem:[#allocation5] sm:$0x1] %vm523, %v522
    // Predicated region
    $region50: #{tpu_custom_call.1} parent=1 // pred_check
      _
    $region51: #{tpu_custom_call.1} parent=1 // pred_check_branch
      %526 = sbr.rel (0) target = $region53
    $region52: #{tpu_custom_call.1} parent=1 // pred_region
      _
    $region53: #{tpu_custom_call.1} parent=1 // pred_fallthru
      _
    // Predicated region
    $region54: #{tpu_custom_call.1} parent=1 // pred_check
      _
    $region55: #{tpu_custom_call.1} parent=1 // pred_check_branch
      %528 = sbr.rel (0) target = $region57
    $region56: #{tpu_custom_call.1} parent=1 // pred_region
      %s530 = ssub.s32 16, 16
      %531 = vsyncadd [#allocation3], %s530
      %s533 = sshll.u32 [#allocation5], 4
      %s534 = int_to_ptr.vmem [resolvable:$true] %s533
      %536 = dma.vmem_to_hbm [thread:$0]  %s534, 16, %s12, [#allocation3]
    $region57: #{tpu_custom_call.1} parent=1 // pred_fallthru
      _
    // Predicated region
    $region58: #{tpu_custom_call.1} parent=1 // pred_check
      _
    $region59: #{tpu_custom_call.1} parent=1 // pred_check_branch
      %538 = sbr.rel (0) target = $region61
    $region60: #{tpu_custom_call.1} parent=1 // pred_region
      _
    $region61: #{tpu_custom_call.1} parent=1 // pred_fallthru
      _
    // Predicated region
    $region62: #{tpu_custom_call.1} parent=1 // pred_check
      _
    $region63: #{tpu_custom_call.1} parent=1 // pred_check_branch
      %540 = sbr.rel (0) target = $region65
    $region64: #{tpu_custom_call.1} parent=1 // pred_region
      %541 = dma.done [#allocation3], 16
    $region65: #{tpu_custom_call.1} parent=1 // pred_fallthru
      _
    %542 = vsyncpa [#allocation3], 1
    %543 = vsyncpa [#allocation4], 1

</llo_original>
